<compile_context>
chip_gen: v7x
topology: tpu7x:2x2x1
jax: 0.10.0
libtpu: 0.0.40
codegen_flags: <defaults>
</compile_context>

<pallas_src>
import functools

import jax
import jax.numpy as jnp
from jax import lax
from jax.experimental import pallas as pl
from jax.experimental.pallas import tpu as pltpu

CLIPMIN = 1e-05
CLIPMAX = 1000000.0

_LANES = 128

# ----------------------- generation-aware static config -----------------------
try:
    _DEVICE_KIND = jax.devices()[0].device_kind.lower()
except Exception:  # pragma: no cover - e.g. no backend at import time
    _DEVICE_KIND = ""
_IS_V7X = "v7" in _DEVICE_KIND

_TR_MAX = 8192 if _IS_V7X else 2048          # rows per block in the large path
_NUM_SLICES = 2 if _IS_V7X else 1            # pass-A partials (2 TCs on v7x)
_FUSED_MAX_ROWS = 8192                       # <= 4 MiB f32 slab -> fused path
_VMEM_LIMIT = (48 if _IS_V7X else 64) * 1024 * 1024


# ------------------------------ in-kernel params ------------------------------

def _qparams(min_val, max_val, bitwidth, is_symmetric):
    """compute_scale_offset_from_min_max -> (scale, qmin-offset, qmax-offset)."""
    min_val = min_val.astype(jnp.float32)
    max_val = max_val.astype(jnp.float32)
    if is_symmetric:
        alpha = jnp.maximum(jnp.abs(min_val), jnp.abs(max_val))
        beta = jnp.float32(0.0)
        q_min = float(-(2 ** (bitwidth - 1)))
        q_max = float(2 ** (bitwidth - 1) - 1)
    else:
        alpha = max_val - min_val
        beta = min_val
        q_min = 0.0
        q_max = float(2 ** bitwidth - 1)
    scale = jnp.clip(alpha / q_max, CLIPMIN, CLIPMAX)
    offset = -jnp.round(beta / scale)
    # clamp(r + offset, q_min, q_max) - offset == clamp(r, q_min-off, q_max-off)
    lo = q_min - offset
    hi = q_max - offset
    return scale, lo, hi


# --------------------------------- kernels -----------------------------------

def _fused_kernel(x_ref, o_ref, *, bitwidth, is_symmetric):
    """Whole slab resident in VMEM: min/max + scale/offset + fake-quant."""
    xv = x_ref[...]                               # native dtype
    mn = jnp.min(xv).astype(jnp.float32)          # min/max exact in any fp dtype
    mx = jnp.max(xv).astype(jnp.float32)
    scale, lo, hi = _qparams(mn, mx, bitwidth, is_symmetric)
    x = xv.astype(jnp.float32)
    q = jnp.clip(jnp.round(x / scale), lo, hi)
    o_ref[...] = (q * scale).astype(o_ref.dtype)


def _minmax_kernel(x_ref, min_ref, max_ref, *, n_blocks, t_inner, tile_rows,
                   valid_rows, needs_mask):
    """Running elementwise min/max into an (8,128) accumulator per slice."""
    t = pl.program_id(1)

    @pl.when(t == 0)
    def _():
        min_ref[...] = jnp.full(min_ref.shape, jnp.inf, dtype=jnp.float32)
        max_ref[...] = jnp.full(max_ref.shape, -jnp.inf, dtype=jnp.float32)

    v = x_ref[...]                                # native dtype (exact min/max)
    g = tile_rows // 8

    def _accum(v_lo, v_hi):
        tmin = jnp.min(v_lo.reshape(g, 8, _LANES), axis=0).astype(jnp.float32)
        tmax = jnp.max(v_hi.reshape(g, 8, _LANES), axis=0).astype(jnp.float32)
        min_ref[...] = jnp.minimum(min_ref[...], tmin[None])
        max_ref[...] = jnp.maximum(max_ref[...], tmax[None])

    if needs_mask:
        # Only compiled in when rows % tile_rows != 0, and only *executed* on
        # the final (partial) block: full blocks keep the pure min/max path.
        p = pl.program_id(0)
        blk = jnp.minimum(p * t_inner + t, n_blocks - 1)
        is_last = blk == n_blocks - 1

        @pl.when(is_last)
        def _():
            row0 = blk * tile_rows
            rows = lax.broadcasted_iota(jnp.int32, v.shape, 0) + row0
            ok = rows < valid_rows
            pinf = jnp.array(jnp.inf, dtype=v.dtype)
            _accum(jnp.where(ok, v, pinf), jnp.where(ok, v, -pinf))

        @pl.when(jnp.logical_not(is_last))
        def _():
            _accum(v, v)
    else:
        _accum(v, v)


def _fq_kernel(pmin_ref, pmax_ref, x_ref, o_ref, *, bitwidth, is_symmetric):
    """Fake-quant map; combines the tiny pass-A partials in-kernel (no glue)."""
    mn = jnp.min(pmin_ref[...])
    mx = jnp.max(pmax_ref[...])
    scale, lo, hi = _qparams(mn, mx, bitwidth, is_symmetric)
    x = x_ref[...].astype(jnp.float32)
    q = jnp.clip(jnp.round(x / scale), lo, hi)
    o_ref[...] = (q * scale).astype(o_ref.dtype)


# ------------------------------ Quantizer.forward -----------------------------

@functools.partial(jax.jit,
                   static_argnames=("bitwidth", "is_symmetric", "fused_max_rows"))
def quantizer_forward(x, bitwidth=8, is_symmetric=False, *, fused_max_rows=None):
    """Dynamic per-tensor fake-quantization (Quantizer.forward, is_dynamic)."""
    if bitwidth > 16:                  # matches `if bitwidth > 16: return x`
        return x
    orig_shape = x.shape
    n = x.size
    if n == 0:
        return x
    if fused_max_rows is None:
        fused_max_rows = _FUSED_MAX_ROWS

    flat = x.reshape(-1)
    # Free reshape to [R, 128] when n % 128 == 0; otherwise pad only the ragged
    # tail with a real (edge) element so the global min/max is unaffected.
    pad = (-n) % _LANES
    if pad:
        flat = jnp.pad(flat, (0, pad), mode="edge")
    x2 = flat.reshape(-1, _LANES)
    rows = x2.shape[0]

    # -------------------- fused fast path: slab fits in VMEM --------------------
    if rows <= fused_max_rows or (rows < _TR_MAX and rows % 8 != 0):
        out2 = pl.pallas_call(
            functools.partial(_fused_kernel, bitwidth=bitwidth,
                              is_symmetric=is_symmetric),
            out_shape=jax.ShapeDtypeStruct(x2.shape, x.dtype),
            in_specs=[pl.BlockSpec(memory_space=pltpu.MemorySpace.VMEM)],
            out_specs=pl.BlockSpec(memory_space=pltpu.MemorySpace.VMEM),
            compiler_params=pltpu.CompilerParams(vmem_limit_bytes=_VMEM_LIMIT),
        )(x2)
    else:
        # ------------------------- large path: two passes -------------------------
        tile_rows = min(_TR_MAX, rows)            # _TR_MAX is a multiple of 8
        n_blocks = -(-rows // tile_rows)
        n_slices = min(_NUM_SLICES, n_blocks)
        t_inner = -(-n_blocks // n_slices)
        needs_mask = (rows % tile_rows) != 0      # partial last block -> mask

        # ---------------- pass A: per-slice partial min/max ----------------
        kern_a = functools.partial(
            _minmax_kernel, n_blocks=n_blocks, t_inner=t_inner,
            tile_rows=tile_rows, valid_rows=rows, needs_mask=needs_mask)

        def _in_map(p, t):
            # Clamp so every DMA stays in-bounds; re-reading the last block for
            # a spare grid step is harmless (min/max are idempotent).
            return (jnp.minimum(p * t_inner + t, n_blocks - 1), 0)

        pmin, pmax = pl.pallas_call(
            kern_a,
            out_shape=(jax.ShapeDtypeStruct((n_slices, 8, _LANES), jnp.float32),
                       jax.ShapeDtypeStruct((n_slices, 8, _LANES), jnp.float32)),
            grid=(n_slices, t_inner),
            in_specs=[pl.BlockSpec((tile_rows, _LANES), _in_map)],
            out_specs=(pl.BlockSpec((1, 8, _LANES), lambda p, t: (p, 0, 0)),
                       pl.BlockSpec((1, 8, _LANES), lambda p, t: (p, 0, 0))),
            compiler_params=pltpu.CompilerParams(
                dimension_semantics=("parallel", "arbitrary"),
                vmem_limit_bytes=_VMEM_LIMIT),
        )(x2)

        # -------- pass B: fake-quant map (combines partials in-kernel) --------
        kern_b = functools.partial(_fq_kernel, bitwidth=bitwidth,
                                   is_symmetric=is_symmetric)
        out2 = pl.pallas_call(
            kern_b,
            out_shape=jax.ShapeDtypeStruct(x2.shape, x.dtype),
            grid=(n_blocks,),
            in_specs=[pl.BlockSpec((n_slices, 8, _LANES), lambda i: (0, 0, 0)),
                      pl.BlockSpec((n_slices, 8, _LANES), lambda i: (0, 0, 0)),
                      pl.BlockSpec((tile_rows, _LANES), lambda i: (i, 0))],
            out_specs=pl.BlockSpec((tile_rows, _LANES), lambda i: (i, 0)),
            compiler_params=pltpu.CompilerParams(
                dimension_semantics=("parallel",),
                vmem_limit_bytes=_VMEM_LIMIT),
        )(pmin, pmax, x2)

    out = out2.reshape(-1)
    if pad:
        out = out[:n]
    return out.reshape(orig_shape)


# ---------------------------------- reference ---------------------------------

def _reference(x, bitwidth=8, is_symmetric=False):
    v = x.astype(jnp.float32)
    mn, mx = jnp.min(v), jnp.max(v)
    if is_symmetric:
        alpha = jnp.maximum(jnp.abs(mn), jnp.abs(mx))
        beta = jnp.float32(0.0)
        qmin = float(-(2 ** (bitwidth - 1)))
        qmax = float(2 ** (bitwidth - 1) - 1)
    else:
        alpha = mx - mn
        beta = mn
        qmin = 0.0
        qmax = float(2 ** bitwidth - 1)
    scale = jnp.clip(alpha / qmax, CLIPMIN, CLIPMAX)
    offset = -jnp.round(beta / scale)
    q = jnp.clip(jnp.round(v / scale) + offset, qmin, qmax)
    return ((q - offset) * scale).astype(x.dtype)


def _check(x, bitwidth=8, is_symmetric=False, **kw):
    out = quantizer_forward(x, bitwidth=bitwidth, is_symmetric=is_symmetric, **kw)
    jax.block_until_ready(out)
    assert out.shape == x.shape and out.dtype == x.dtype
    ref = _reference(x, bitwidth, is_symmetric)

    v = x.astype(jnp.float32)
    if is_symmetric:
        step = jnp.maximum(jnp.abs(jnp.min(v)), jnp.abs(jnp.max(v))) / float(
            2 ** (bitwidth - 1) - 1)
    else:
        step = (jnp.max(v) - jnp.min(v)) / float(2 ** bitwidth - 1)
    step = float(jnp.clip(step, CLIPMIN, CLIPMAX))

    err = jnp.abs(out.astype(jnp.float32) - ref.astype(jnp.float32))
    max_err = float(jnp.max(err))
    # Nearly all elements must match to (sub-)ulp accuracy; allow at most a
    # vanishing fraction of one-quant-step flips from divide rounding noise.
    frac_close = float(jnp.mean((err <= 1e-5 + 1e-3 * step).astype(jnp.float32)))
    if max_err > step * 1.05 + 1e-4 or frac_close < 0.999:
        raise AssertionError(
            f"mismatch vs reference: max_err={max_err}, step={step}, "
            f"frac_close={frac_close}")


if __name__ == "__main__":
    key = jax.random.PRNGKey(0)
    k0, k1, k2, k3 = jax.random.split(key, 4)

    # NCHW-ish activation, asymmetric 8-bit (default config path) - fused path.
    x0 = jax.random.normal(k0, (2, 4, 16, 16), dtype=jnp.float32)
    _check(x0, bitwidth=8, is_symmetric=False)

    # Symmetric 8-bit on the same tensor.
    _check(x0, bitwidth=8, is_symmetric=True)

    # bf16 activation (native-dtype min/max path), 4-bit asymmetric.
    x1 = jax.random.normal(k1, (8, 32, 128), dtype=jnp.bfloat16)
    _check(x1, bitwidth=4, is_symmetric=False)

    # Awkward size (exercises the rare tail-pad path).
    x2 = jax.random.normal(k2, (3, 5, 7, 11), dtype=jnp.float32)
    _check(x2, bitwidth=8, is_symmetric=False)

    # Force the large two-pass path (pass A partials + in-kernel param fold;
    # exercises the masked partial last block on v5e/v6e tile sizes).
    x3 = jax.random.normal(k3, (2056, 128), dtype=jnp.float32)
    _check(x3, bitwidth=8, is_symmetric=False, fused_max_rows=0)

    # Passthrough for bitwidth > 16.
    y = quantizer_forward(x0, bitwidth=32)
    jax.block_until_ready(y)
    assert bool(jnp.all(y == x0))

    print("KERNEL_OK")
</pallas_src>

<mosaic_0001>
module attributes {stable_mosaic.version = 11 : i64} {
  func.func @_fused_kernel(%arg0: memref<16x128xf32, #tpu.memory_space<vmem>>, %arg1: memref<16x128xf32, #tpu.memory_space<vmem>>) attributes {dimension_semantics = [], scalar_prefetch = 0 : i64, scratch_operands = 0 : i64, tpu.core_type = #tpu.core_type<tc>} {
    %c0 = arith.constant 0 : index
    %c0_0 = arith.constant 0 : index
    %0 = vector.load %arg0[%c0, %c0_0] : memref<16x128xf32, #tpu.memory_space<vmem>>, vector<16x128xf32>
    %1 = vector.shape_cast %0 : vector<16x128xf32> to vector<1x16x128xf32>
    %cst = arith.constant dense<0x7F800000> : vector<1xf32>
    %2 = vector.multi_reduction <minimumf>, %1, %cst [1, 2] : vector<1x16x128xf32> to vector<1xf32>
    %3 = vector.shape_cast %2 : vector<1xf32> to vector<1x1x1xf32>
    %4 = vector.extract %3[0, 0, 0] : f32 from vector<1x1x1xf32>
    %5 = vector.shape_cast %0 : vector<16x128xf32> to vector<1x16x128xf32>
    %cst_1 = arith.constant dense<0xFF800000> : vector<1xf32>
    %6 = vector.multi_reduction <maximumf>, %5, %cst_1 [1, 2] : vector<1x16x128xf32> to vector<1xf32>
    %7 = vector.shape_cast %6 : vector<1xf32> to vector<1x1x1xf32>
    %8 = vector.extract %7[0, 0, 0] : f32 from vector<1x1x1xf32>
    %9 = arith.subf %8, %4 : f32
    %cst_2 = arith.constant 2.550000e+02 : f32
    %10 = arith.divf %9, %cst_2 : f32
    %cst_3 = arith.constant 9.99999974E-6 : f32
    %cst_4 = arith.constant 1.000000e+06 : f32
    %11 = arith.maximumf %cst_3, %10 : f32
    %12 = arith.minimumf %cst_4, %11 : f32
    %13 = arith.divf %4, %12 : f32
    %14 = math.roundeven %13 : f32
    %cst_5 = arith.constant 0.000000e+00 : f32
    %15 = arith.subf %cst_5, %14 : f32
    %cst_6 = arith.constant 0.000000e+00 : f32
    %16 = arith.subf %cst_6, %15 : f32
    %cst_7 = arith.constant 2.550000e+02 : f32
    %17 = arith.subf %cst_7, %15 : f32
    %18 = vector.broadcast %12 : f32 to vector<16x128xf32>
    %19 = arith.divf %0, %18 : vector<16x128xf32>
    %20 = math.roundeven %19 : vector<16x128xf32>
    %21 = vector.broadcast %16 : f32 to vector<16x128xf32>
    %22 = arith.maximumf %21, %20 : vector<16x128xf32>
    %23 = vector.broadcast %17 : f32 to vector<16x128xf32>
    %24 = arith.minimumf %23, %22 : vector<16x128xf32>
    %25 = vector.broadcast %12 : f32 to vector<16x128xf32>
    %26 = arith.mulf %24, %25 : vector<16x128xf32>
    %c0_8 = arith.constant 0 : index
    %c0_9 = arith.constant 0 : index
    %27 = vector.load %arg1[%c0_8, %c0_9] : memref<16x128xf32, #tpu.memory_space<vmem>>, vector<16x128xf32>
    tpu.vector_store %arg1[%c0_8, %c0_9], %26 {strides = array<i32>} : memref<16x128xf32, #tpu.memory_space<vmem>>, vector<16x128xf32>,
    return
  }
}

</mosaic_0001>

<llo_original>
// kernel: quantizer_forward.1
$region0: #{quantizer_forward.1}
  #allocation0 [shape = 'u32[]', space=smem, size = 0x4, offset = 0x4, fixed_abs, tag = 'smem constant byte address 0x4 - core index']
  #allocation1 [shape = 'u32[144,128]{1,0:T(1,128)}', space=vmem, size = 0x12000, scoped, tag = 'internal scratch']
  %s0 = inlined_call_operand.hbm [shape: f32[16,128], index: 0, kind: input, shape index: {}]
  %s1 = inlined_call_operand.hbm [shape: f32[16,128], index: 1, kind: output, shape index: {}]
  %s2 = sld [smem:[#allocation0]]
  $region18: #{quantizer_forward.1} parent=0
    _
  %s4 = ssub.s32 1, %s2
  %s5 = scalar_select 0, %s4, %s2
  $region1: #{quantizer_forward.1} parent=0
    #allocation2 [shape = 'u8[8192]{0}', space=vmem, size = 0x2000, scoped, tag = 'input window, operand 0, single buffered']
    #allocation3 [shape = 's32[1]{0}', space=sflag, size = 0x4, scoped, tag = 'scoped memory for quantizer_forward.1']
    #allocation4 [shape = 's32[1]{0}', space=sflag, size = 0x4, scoped, tag = 'scoped memory for quantizer_forward.1']
    #allocation5 [shape = 'u8[8192]{0}', space=vmem, size = 0x2000, scoped, tag = 'output window, operand 0, single buffered']
    %6 = vsyncpa [#allocation3], 0
    %7 = vsyncpa [#allocation4], 0
    // Predicated region
    $region2: #{quantizer_forward.1} parent=1 // pred_check
      _
    $region3: #{quantizer_forward.1} parent=1 // pred_check_branch
      %9 = sbr.rel (0) target = $region5
    $region4: #{quantizer_forward.1} parent=1 // pred_region
      %s11 = ssub.s32 256, 256
      %12 = vsyncadd [#allocation3], %s11
      %s13 = sshll.u32 [#allocation2], 4
      %s14 = int_to_ptr.vmem [resolvable:$true] %s13
      %19 = dma.hbm_to_vmem [thread:$0]  %s0, 256, %s14, [#allocation3], 128, 128, 8
    $region5: #{quantizer_forward.1} parent=1 // pred_fallthru
      _
    // Predicated region
    $region6: #{quantizer_forward.1} parent=1 // pred_check
      _
    $region7: #{quantizer_forward.1} parent=1 // pred_check_branch
      %21 = sbr.rel (0) target = $region9
    $region8: #{quantizer_forward.1} parent=1 // pred_region
      %22 = dma.done [#allocation3], 256
    $region9: #{quantizer_forward.1} parent=1 // pred_fallthru
      _
    %v23 = vld [vmem:[#allocation2] sm:$0xff]
    %v24 = vld [vmem:[#allocation2 + $0x8] sm:$0xff]
    %v25 = vmin.f32 %v23, %v24
    %26 = vmin.xlane.f32.xlu0 %v25
    %v27 = vpop.xlane.xlu0 %26
    %v28 = vrot.slane %v27, 4
    %v29 = vmin.f32 %v27, %v28
    %v30 = vrot.slane %v29, 2
    %v31 = vmin.f32 %v29, %v30
    %v32 = vrot.slane %v31, 1
    %v33 = vmin.f32 %v31, %v32
    %s34 = vtos %v33
    %v35 = vmax.f32 %v23, %v24
    %36 = vmax.xlane.f32.xlu0 %v35
    %v37 = vpop.xlane.xlu0 %36
    %v38 = vrot.slane %v37, 4
    %v39 = vmax.f32 %v37, %v38
    %v40 = vrot.slane %v39, 2
    %v41 = vmax.f32 %v39, %v40
    %v42 = vrot.slane %v41, 1
    %v43 = vmax.f32 %v41, %v42
    %s44 = vtos %v43
    %s45 = ssub.f32 %s44, %s34
    %v46 = vrcp.pop 255.0
    %s47 = vtos %v46
    %s48 = smul.f32 %s45, %s47
    %s49 = smax.f32 %s48, 1e-05
    %s50 = smin.f32 %s49, 1000000.0
    %v51 = vstv %s50
    %v52 = vrcp.pop %v51
    %s53 = vtos %v52
    %s54 = smul.f32 %s34, %s53
    %s55 = scvt.f32.s32 %s54
    %s56 = scvt.s32.f32 %s55
    %s57 = sand.u32 2147483647, %s56
    %s58 = sand.u32 %s54, 2147483648
    %s59 = sor.u32 %s57, %s58
    %s60 = sand.u32 2147483647, %s54
    %p61 = scmp.lt.f32.partialorder %s60, 2.1474836e+09
    %s62 = scalar_select %p61, %s59, %s54
    %s63 = ssub.f32 0.0, %s62
    %s64 = ssub.f32 0.0, %s63
    %s65 = ssub.f32 255.0, %s63
    %v66 = vstv %s50
    %v67 = vrcp.pop %v66
    %v68 = vmul.f32 %v23, %v67
    %v69 = vmul.f32 %v24, %v67
    %v70 = vround.ne.pseudo %v68
    %v71 = vround.ne.pseudo %v69
    %v72 = vstv %s64
    %v73 = vmax.f32 %v72, %v70
    %v74 = vmax.f32 %v72, %v71
    %v75 = vstv %s65
    %v76 = vmin.f32 %v75, %v73
    %v77 = vmin.f32 %v75, %v74
    %v78 = vmul.f32 %v76, %v66
    %v79 = vmul.f32 %v77, %v66
    %80 = vst [vmem:[#allocation5] sm:$0xff] %v78
    %81 = vst [vmem:[#allocation5 + $0x8] sm:$0xff] %v79
    // Predicated region
    $region10: #{quantizer_forward.1} parent=1 // pred_check
      _
    $region11: #{quantizer_forward.1} parent=1 // pred_check_branch
      %83 = sbr.rel (0) target = $region13
    $region12: #{quantizer_forward.1} parent=1 // pred_region
      %s85 = ssub.s32 256, 256
      %86 = vsyncadd [#allocation4], %s85
      %s87 = sshll.u32 [#allocation5], 4
      %s88 = int_to_ptr.vmem [resolvable:$true] %s87
      %93 = dma.vmem_to_hbm [thread:$0]  %s88, 256, %s1, [#allocation4], 128, 128, 8
    $region13: #{quantizer_forward.1} parent=1 // pred_fallthru
      _
    // Predicated region
    $region14: #{quantizer_forward.1} parent=1 // pred_check
      _
    $region15: #{quantizer_forward.1} parent=1 // pred_check_branch
      %95 = sbr.rel (0) target = $region17
    $region16: #{quantizer_forward.1} parent=1 // pred_region
      %96 = dma.done [#allocation4], 256
    $region17: #{quantizer_forward.1} parent=1 // pred_fallthru
      _
    %97 = vsyncpa [#allocation3], 1
    %98 = vsyncpa [#allocation4], 1

</llo_original>
